<compile_context>
chip_gen: v7x
topology: tpu7x:2x2x1
jax: 0.10.0
libtpu: 0.0.40
codegen_flags: <defaults>
</compile_context>

<pallas_src>
import math

import jax
import jax.numpy as jnp
from jax.experimental import pallas as pl
from jax.experimental.pallas import tpu as pltpu


def _make_kernel(sigma: float, input_size: int, *, use_mxu: bool, separable: bool):
    var = float(sigma) ** 2
    coef = 1.0 / (2.0 * math.pi * var)            # MVN normalization const for cov = sigma^2 * I(2)
    inv_2var = 1.0 / (2.0 * var)
    half_inv_in2 = 0.5 / (float(input_size) ** 2)  # folded conc-loss constant
    H = W = int(input_size)
    S = H * W
    cy = cx = (float(input_size) - 1.0) / 2.0      # grid center (MXU moment centering)

    need_flat_grids = (not use_mxu) or (not separable)

    def _flat_grids():
        # Row-major flatten (torch.meshgrid indexing='ij'): yv[c] = c // W, xv[c] = c % W.
        if W & (W - 1) == 0:
            # power-of-two W: int shift/mask instead of the f32 divide/floor/mul/sub chain
            ci = jax.lax.broadcasted_iota(jnp.int32, (1, S), 1)
            sh = W.bit_length() - 1
            yv = (ci >> sh).astype(jnp.float32)
            xv = (ci & (W - 1)).astype(jnp.float32)
        else:
            c = jax.lax.broadcasted_iota(jnp.float32, (1, S), 1)   # exact in f32 for S < 2^24
            yv = jnp.floor((c + 0.5) / float(W))
            xv = c - yv * float(W)
        return yv, xv

    def kernel(*refs):
        if use_mxu:
            y_ref, g_ref, proj_ref, stats_ref = refs
        else:
            y_ref, proj_ref, stats_ref = refs

        y = y_ref[...].astype(jnp.float32)                       # (TR, S)
        tr = y.shape[0]

        # layer-wise softmax over the flattened spatial axis; normalization folded into the
        # reductions via a (TR,1) reciprocal -- `soft` is never materialized.
        m = jnp.max(y, axis=-1, keepdims=True)
        p = jnp.exp(y - m)                                       # (TR, S) unnormalized

        if need_flat_grids:
            yv, xv = _flat_grids()                               # (1, S) each

        if use_mxu:
            # Weighted-moment reductions on the (otherwise idle) MXU: one (TR,S)x(S,128) matmul.
            # G lanes: [1, yc, xc, yc^2+xc^2, 0...] with coords centered on the grid center so
            # the "2nd moment - mean^2" recovery has no f32 cancellation problem.
            m4 = jnp.dot(p, g_ref[...], preferred_element_type=jnp.float32,
                         precision=jax.lax.Precision.HIGHEST)    # (TR, 128)
            sp = m4[:, 0:1]                                      # sum p
            syc = m4[:, 1:2]                                     # sum p*yc
            sxc = m4[:, 2:3]                                     # sum p*xc
            s2c = m4[:, 3:4]                                     # sum p*(yc^2+xc^2)
            r = pl.reciprocal(sp, approx=False)                  # (TR, 1)
            mu_yc = syc * r
            mu_xc = sxc * r
            mu_y = mu_yc + cy
            mu_x = mu_xc + cx
            conc = half_inv_in2 * jnp.maximum(
                s2c * r - mu_yc * mu_yc - mu_xc * mu_xc, 0.0)    # (TR, 1)
        else:
            r = pl.reciprocal(jnp.sum(p, axis=-1, keepdims=True), approx=False)
            mu_y = jnp.sum(p * yv, axis=-1, keepdims=True) * r
            mu_x = jnp.sum(p * xv, axis=-1, keepdims=True) * r

        if (not use_mxu) or (not separable):
            # flat squared-distance grid (needed for the flat proj store and/or the VPU conc)
            dy = yv - mu_y                                       # (TR, S)
            dx = xv - mu_x
            d2 = dy * dy + dx * dx

        if not use_mxu:
            # concentration-loss term, reusing d2 with the 0.5/in^2 constant folded at trace time
            conc = half_inv_in2 * (jnp.sum(p * d2, axis=-1, keepdims=True) * r)

        # Gaussian-like re-projection: exp(log_prob) of N(mu, sigma^2 * I) on the grid.
        if separable:
            # exp(-d2/2s^2) = exp(-dy^2/2s^2) * exp(-dx^2/2s^2): H+W EUP pushes per row instead
            # of H*W, expanded via a per-row outer product into a lane-dense (TR,H,W) block.
            hg = jax.lax.broadcasted_iota(jnp.float32, (tr, H), 1)
            wg = jax.lax.broadcasted_iota(jnp.float32, (tr, W), 1)
            dyh = hg - mu_y                                      # (TR, H)
            dxw = wg - mu_x                                      # (TR, W)
            ey = coef * jnp.exp(-(dyh * dyh) * inv_2var)         # (TR, H), coef folded once
            ex = jnp.exp(-(dxw * dxw) * inv_2var)                # (TR, W)
            proj_ref[...] = (ey[:, :, None] * ex[:, None, :]).astype(proj_ref.dtype)
        else:
            proj_ref[...] = (coef * jnp.exp(-d2 * inv_2var)).astype(proj_ref.dtype)

        # lane-packed per-row stats, trimmed to 8 lanes: [mu_y, mu_x, conc, 0...]
        lane = jax.lax.broadcasted_iota(jnp.int32, stats_ref.shape, 1)
        stats_ref[...] = jnp.where(lane == 0, mu_y,
                         jnp.where(lane == 1, mu_x,
                         jnp.where(lane == 2, conc, 0.0)))

    return kernel


def _moment_matrix(input_size: int):
    """Constant (S, 128) moment matrix: lanes [1, yc, xc, yc^2+xc^2, 0...], coords centered."""
    H = W = int(input_size)
    yv = jnp.repeat(jnp.arange(H, dtype=jnp.float32), W)
    xv = jnp.tile(jnp.arange(W, dtype=jnp.float32), H)
    cy = cx = (float(input_size) - 1.0) / 2.0
    yc = yv - cy
    xc = xv - cx
    g = jnp.zeros((H * W, 128), jnp.float32)
    g = g.at[:, 0].set(1.0)
    g = g.at[:, 1].set(yc)
    g = g.at[:, 2].set(xc)
    g = g.at[:, 3].set(yc * yc + xc * xc)
    return g


def _vmem_capacity_bytes() -> int:
    """Physical VMEM per TensorCore (defensive: fall back to the 128 MiB v5e/v6e class)."""
    try:
        info = pltpu.get_tpu_info()
        for name in ("vmem_capacity_bytes", "vmem_bytes", "vmem_size_bytes"):
            v = getattr(info, name, None)
            if v:
                return int(v)
    except Exception:
        pass
    return 128 << 20


def _choose_rows(bl: int, s: int, *, small_vmem: bool, max_rows: int = 1024):
    """Pick the row tile TR (multiple of 8) and the padded row count from a VMEM byte budget."""
    target_tile_bytes = (1 << 20) if small_vmem else (4 << 20)   # v7x 64MiB/TC vs v5e/v6e 128MiB
    bytes_per_row = s * 4
    tr = max(8, min(max_rows, target_tile_bytes // bytes_per_row))
    tr = (tr // 8) * 8
    bl8 = ((bl + 7) // 8) * 8
    tr = min(tr, bl8)
    steps = -(-bl8 // tr)
    n_tiles8 = bl8 // 8
    if steps < 4 <= n_tiles8:
        # lengthen the grid to ~4 steps so the auto-pipeline can overlap in-DMA/compute/out-DMA
        tr = (-(-n_tiles8 // 4)) * 8
        steps = -(-bl8 // tr)
    if small_vmem and steps > 1 and steps % 2 == 1:
        # dual-TensorCore parts: prefer an even step count so both cores get equal work
        tr_even = (-(-n_tiles8 // (steps + 1))) * 8
        if tr_even >= 8 and (-(-bl8 // tr_even)) % 2 == 0:
            tr = tr_even
            steps = -(-bl8 // tr_even)
    return tr, steps * tr


def heatmap_projection(y, *, sigma, landmarks, input_size, lam_1=1.0, lam_2=1.0,
                       proj_dtype=None):
    B, L, H, W = y.shape
    assert L == landmarks and H == input_size and W == input_size
    S = H * W
    BL = B * L
    # proj_dtype=jnp.bfloat16 halves the dominant HBM write stream on bandwidth-bound parts,
    # but yields ~4e-3 relative error vs the f32 reference; default keeps y.dtype.
    proj_dtype = y.dtype if proj_dtype is None else jnp.dtype(proj_dtype)

    vmem_cap = _vmem_capacity_bytes()
    small_vmem = vmem_cap <= (96 << 20)                 # 64 MiB/TC (v7x-class) parts

    TR, BL_pad = _choose_rows(BL, S, small_vmem=small_vmem)
    grid = (BL_pad // TR,)

    # MXU moment path only while the double-buffered (S,128) moment matrix stays cheap in VMEM.
    use_mxu = (2 * S * 128 * 4) <= (16 << 20)
    # Separable re-projection needs a lane-dense (TR,H,W) output block.
    separable = (W % 128 == 0)

    y_flat = y.reshape(BL, S)
    if BL_pad != BL:
        # pad with zero rows (uniform softmax; harmless, sliced away below)
        y_flat = jnp.pad(y_flat, ((0, BL_pad - BL), (0, 0)))

    # VMEM working-set estimate: double-buffered in/out tiles + ~4 live (TR,S) f32 temporaries
    # (+ the resident moment matrix).  Guard explicitly instead of silently hitting a cap.
    in_tile = TR * S * 4
    out_tile = TR * S * jnp.dtype(proj_dtype).itemsize
    g_bytes = (2 * S * 128 * 4) if use_mxu else 0
    est = 2 * in_tile + 2 * out_tile + 4 * in_tile + g_bytes
    if est > int(0.8 * vmem_cap):
        # TODO(synk): tile the spatial axis (two-pass: moments, then projection) for huge heatmaps.
        raise ValueError(
            f"HeatmapProjection working set (~{est >> 20} MiB) exceeds VMEM "
            f"({vmem_cap >> 20} MiB) for input_size={input_size}; spatial-axis tiling needed.")
    if small_vmem:
        vmem_limit = min(40 << 20, max(28 << 20, est + (6 << 20)))
    else:
        vmem_limit = min(64 << 20, max(32 << 20, est + (8 << 20)))

    in_specs = [pl.BlockSpec((TR, S), lambda i: (i, 0))]          # heatmaps
    inputs = [y_flat]
    if use_mxu:
        # constant block (same index every step -> DMA'd once, stays resident)
        in_specs.append(pl.BlockSpec((S, 128), lambda i: (0, 0)))
        inputs.append(_moment_matrix(input_size))

    if separable:
        proj_shape = (BL_pad, H, W)
        proj_spec = pl.BlockSpec((TR, H, W), lambda i: (i, 0, 0))
    else:
        proj_shape = (BL_pad, S)
        proj_spec = pl.BlockSpec((TR, S), lambda i: (i, 0))

    proj, stats = pl.pallas_call(
        _make_kernel(sigma, input_size, use_mxu=use_mxu, separable=separable),
        out_shape=(
            jax.ShapeDtypeStruct(proj_shape, proj_dtype),         # re-projected heatmaps
            jax.ShapeDtypeStruct((BL_pad, 8), jnp.float32),       # lanes: [mu_y, mu_x, conc, 0..]
        ),
        grid_spec=pltpu.PrefetchScalarGridSpec(
            num_scalar_prefetch=0,
            grid=grid,
            in_specs=in_specs,
            out_specs=[proj_spec, pl.BlockSpec((TR, 8), lambda i: (i, 0))],
        ),
        compiler_params=pltpu.CompilerParams(
            dimension_semantics=("parallel",),
            vmem_limit_bytes=int(vmem_limit)),
    )(*inputs)

    y_projected = proj[:BL].reshape(B, L, H, W)
    mu_y = stats[:BL, 0].reshape(B, L)
    mu_x = stats[:BL, 1].reshape(B, L)
    conc = stats[:BL, 2].reshape(B, L)

    # ---------- prior loss (tiny (B, L, L) landmark-pair work: plain-JAX glue) ----------
    var_h = conc.mean(-1)                                             # (B,)  == conc_loss(...)
    h = jnp.stack([mu_y, mu_x], axis=-1) / float(input_size)          # (B, L, 2) (h_ij /= input_size)
    # batch_pairwise_distances (same x_norm + y_norm - 2 x y^T formulation)
    h_norm = jnp.sum(h * h, axis=-1)                                  # (B, L)
    dist = (h_norm[:, :, None] + h_norm[:, None, :]
            - 2.0 * jnp.einsum('bid,bjd->bij', h, h))                 # (B, L, L)
    dist = jnp.where(jnp.isnan(dist), 0.0, dist)
    dist = jnp.maximum(dist, 0.0)
    var_n = (float(sigma) ** 2) / float(input_size) ** 2
    sep = jnp.exp(-dist / (2.0 * var_n))
    sep = 0.5 * sep * (1.0 - jnp.eye(L, dtype=sep.dtype)[None])
    prior = lam_1 * sep.reshape(B, -1).sum(-1) + lam_2 * var_h.mean()  # (B,) + scalar broadcast
    loss = prior.mean()
    return y_projected, loss


def _reference(y, sigma, input_size):
    """Pure-JAX replica of the PyTorch forward, for sanity checks."""
    B, L, H, W = y.shape
    S = H * W
    yv = jnp.repeat(jnp.arange(H, dtype=jnp.float32), W)
    xv = jnp.tile(jnp.arange(W, dtype=jnp.float32), H)
    soft = jax.nn.softmax(y.reshape(B, L, S), axis=-1)
    mu_y = (soft * yv).sum(-1)
    mu_x = (soft * xv).sum(-1)
    var = float(sigma) ** 2
    d2 = (yv[None, None] - mu_y[..., None]) ** 2 + (xv[None, None] - mu_x[..., None]) ** 2
    proj = (1.0 / (2.0 * math.pi * var)) * jnp.exp(-d2 / (2.0 * var))
    proj = proj.reshape(B, L, H, W)
    conc = 0.5 * (soft * (((yv - mu_y[..., None]) / input_size) ** 2
                          + ((xv - mu_x[..., None]) / input_size) ** 2)).sum(-1)
    var_h = conc.mean(-1)
    h = jnp.stack([mu_y, mu_x], -1) / input_size
    dist = ((h[:, :, None, :] - h[:, None, :, :]) ** 2).sum(-1)
    var_n = var / input_size ** 2
    sep = 0.5 * jnp.exp(-dist / (2.0 * var_n)) * (1.0 - jnp.eye(L)[None])
    prior = sep.reshape(B, -1).sum(-1) + var_h.mean()
    return proj, prior.mean()


if __name__ == "__main__":
    sigma = 2.0

    def _check(batch, landmarks, input_size, proj_rtol, proj_atol):
        key = jax.random.PRNGKey(0)
        y = jax.random.normal(key, (batch, landmarks, input_size, input_size),
                              dtype=jnp.float32)
        y_projected, prior_loss = heatmap_projection(
            y, sigma=sigma, landmarks=landmarks, input_size=input_size)
        y_projected = jax.block_until_ready(y_projected)
        prior_loss = jax.block_until_ready(prior_loss)
        ref_proj, ref_loss = _reference(y, sigma, input_size)
        assert y_projected.shape == y.shape and y_projected.dtype == y.dtype
        assert jnp.allclose(y_projected, ref_proj, rtol=proj_rtol, atol=proj_atol), \
            ("proj mismatch", batch, landmarks, input_size)
        assert jnp.allclose(prior_loss, ref_loss, rtol=1e-3, atol=1e-5), \
            ("loss mismatch", batch, landmarks, input_size)

    # Main config (MXU-moment path + flat projection store), strict tolerances.
    _check(2, 4, 16, 1e-3, 1e-5)
    # MXU-moment path + separable projection (lane-dense (TR,H,W) block).  Looser proj
    # tolerance: far-from-mean exp() tails amplify tiny mu differences at larger grids.
    _check(1, 2, 128, 2e-2, 1e-4)
    # VPU-reduction fallback (moment matrix too big for VMEM) + separable projection.
    _check(1, 2, 256, 2e-2, 1e-4)

    print("KERNEL_OK")
</pallas_src>

<mosaic_0001>
module attributes {stable_mosaic.version = 11 : i64} {
  func.func @kernel(%arg0: i32, %arg1: memref<8x256xf32, #tpu.memory_space<vmem>>, %arg2: memref<256x128xf32, #tpu.memory_space<vmem>>, %arg3: memref<8x256xf32, #tpu.memory_space<vmem>>, %arg4: memref<8x8xf32, #tpu.memory_space<vmem>>) attributes {dimension_semantics = [#tpu.dimension_semantics<parallel>], iteration_bounds = array<i64: 1>, scalar_prefetch = 0 : i64, scratch_operands = 0 : i64, tpu.core_type = #tpu.core_type<tc>, window_params = [{transform_indices = @transform_0, window_bounds = array<i64: 8, 256>}, {pipeline_mode = #tpu.pipeline_mode<synchronous>, transform_indices = @transform_1, window_bounds = array<i64: 256, 128>}, {transform_indices = @transform_2, window_bounds = array<i64: 8, 256>}, {transform_indices = @transform_3, window_bounds = array<i64: 8, 8>}]} {
    %c0 = arith.constant 0 : index
    %c0_0 = arith.constant 0 : index
    %0 = vector.load %arg1[%c0, %c0_0] : memref<8x256xf32, #tpu.memory_space<vmem>>, vector<8x256xf32>
    %cst = arith.constant dense<0xFF800000> : vector<8xf32>
    %1 = vector.multi_reduction <maximumf>, %0, %cst [1] : vector<8x256xf32> to vector<8xf32>
    %2 = vector.shape_cast %1 : vector<8xf32> to vector<8x1xf32>
    %3 = vector.broadcast %2 : vector<8x1xf32> to vector<8x256xf32>
    %4 = arith.subf %0, %3 : vector<8x256xf32>
    %5 = math.exp %4 : vector<8x256xf32>
    %6 = tpu.iota {dimensions = array<i32: 1>} : vector<1x256xi32>
    %c4_i32 = arith.constant 4 : i32
    %7 = vector.broadcast %c4_i32 : i32 to vector<1x256xi32>
    %8 = arith.shrsi %6, %7 : vector<1x256xi32>
    %9 = arith.sitofp %8 : vector<1x256xi32> to vector<1x256xf32>
    %c15_i32 = arith.constant 15 : i32
    %10 = vector.broadcast %c15_i32 : i32 to vector<1x256xi32>
    %11 = arith.andi %6, %10 : vector<1x256xi32>
    %12 = arith.sitofp %11 : vector<1x256xi32> to vector<1x256xf32>
    %c0_1 = arith.constant 0 : index
    %c0_2 = arith.constant 0 : index
    %13 = vector.load %arg2[%c0_1, %c0_2] : memref<256x128xf32, #tpu.memory_space<vmem>>, vector<256x128xf32>
    %cst_3 = arith.constant dense<0.000000e+00> : vector<8x128xf32>
    %14 = tpu.matmul %5, %13, %cst_3 {dimension_numbers = #tpu.dot_dimension_numbers<[1], [0], [0], [1], [0, 0, 1, 1], [], []>, precision = #tpu.contract_precision<fp32>} : vector<8x256xf32>, vector<256x128xf32>, vector<8x128xf32> -> vector<8x128xf32>
    %15 = vector.extract_strided_slice %14 {offsets = [0, 0], sizes = [8, 1], strides = [1, 1]} : vector<8x128xf32> to vector<8x1xf32>
    %16 = vector.extract_strided_slice %14 {offsets = [0, 1], sizes = [8, 1], strides = [1, 1]} : vector<8x128xf32> to vector<8x1xf32>
    %17 = vector.extract_strided_slice %14 {offsets = [0, 2], sizes = [8, 1], strides = [1, 1]} : vector<8x128xf32> to vector<8x1xf32>
    %18 = vector.extract_strided_slice %14 {offsets = [0, 3], sizes = [8, 1], strides = [1, 1]} : vector<8x128xf32> to vector<8x1xf32>
    %19 = tpu.reciprocal %15 : vector<8x1xf32> -> vector<8x1xf32>
    %20 = arith.mulf %16, %19 : vector<8x1xf32>
    %21 = arith.mulf %17, %19 : vector<8x1xf32>
    %cst_4 = arith.constant 7.500000e+00 : f32
    %22 = vector.broadcast %cst_4 : f32 to vector<8x1xf32>
    %23 = arith.addf %20, %22 : vector<8x1xf32>
    %cst_5 = arith.constant 7.500000e+00 : f32
    %24 = vector.broadcast %cst_5 : f32 to vector<8x1xf32>
    %25 = arith.addf %21, %24 : vector<8x1xf32>
    %26 = arith.mulf %18, %19 : vector<8x1xf32>
    %27 = arith.mulf %20, %20 : vector<8x1xf32>
    %28 = arith.subf %26, %27 : vector<8x1xf32>
    %29 = arith.mulf %21, %21 : vector<8x1xf32>
    %30 = arith.subf %28, %29 : vector<8x1xf32>
    %cst_6 = arith.constant 0.000000e+00 : f32
    %31 = vector.broadcast %cst_6 : f32 to vector<8x1xf32>
    %32 = arith.maximumf %30, %31 : vector<8x1xf32>
    %cst_7 = arith.constant 0.001953125 : f32
    %33 = vector.broadcast %cst_7 : f32 to vector<8x1xf32>
    %34 = arith.mulf %33, %32 : vector<8x1xf32>
    %35 = vector.broadcast %9 : vector<1x256xf32> to vector<8x256xf32>
    %36 = vector.broadcast %23 : vector<8x1xf32> to vector<8x256xf32>
    %37 = arith.subf %35, %36 : vector<8x256xf32>
    %38 = vector.broadcast %12 : vector<1x256xf32> to vector<8x256xf32>
    %39 = vector.broadcast %25 : vector<8x1xf32> to vector<8x256xf32>
    %40 = arith.subf %38, %39 : vector<8x256xf32>
    %41 = arith.mulf %37, %37 : vector<8x256xf32>
    %42 = arith.mulf %40, %40 : vector<8x256xf32>
    %43 = arith.addf %41, %42 : vector<8x256xf32>
    %cst_8 = arith.constant 0.000000e+00 : f32
    %44 = vector.broadcast %cst_8 : f32 to vector<8x256xf32>
    %45 = arith.subf %44, %43 : vector<8x256xf32>
    %cst_9 = arith.constant 1.250000e-01 : f32
    %46 = vector.broadcast %cst_9 : f32 to vector<8x256xf32>
    %47 = arith.mulf %45, %46 : vector<8x256xf32>
    %48 = math.exp %47 : vector<8x256xf32>
    %cst_10 = arith.constant 0.0397887342 : f32
    %49 = vector.broadcast %cst_10 : f32 to vector<8x256xf32>
    %50 = arith.mulf %49, %48 : vector<8x256xf32>
    %c0_11 = arith.constant 0 : index
    %c0_12 = arith.constant 0 : index
    %51 = vector.load %arg3[%c0_11, %c0_12] : memref<8x256xf32, #tpu.memory_space<vmem>>, vector<8x256xf32>
    tpu.vector_store %arg3[%c0_11, %c0_12], %50 {strides = array<i32>} : memref<8x256xf32, #tpu.memory_space<vmem>>, vector<8x256xf32>,
    %52 = tpu.iota {dimensions = array<i32: 1>} : vector<8x8xi32>
    %c0_i32 = arith.constant 0 : i32
    %53 = vector.broadcast %c0_i32 : i32 to vector<8x8xi32>
    %54 = arith.cmpi eq, %52, %53 : vector<8x8xi32>
    %c1_i32 = arith.constant 1 : i32
    %55 = vector.broadcast %c1_i32 : i32 to vector<8x8xi32>
    %56 = arith.cmpi eq, %52, %55 : vector<8x8xi32>
    %c2_i32 = arith.constant 2 : i32
    %57 = vector.broadcast %c2_i32 : i32 to vector<8x8xi32>
    %58 = arith.cmpi eq, %52, %57 : vector<8x8xi32>
    %cst_13 = arith.constant 0.000000e+00 : f32
    %59 = vector.shape_cast %34 : vector<8x1xf32> to vector<8x1xf32>
    %60 = vector.broadcast %59 : vector<8x1xf32> to vector<8x8xf32>
    %61 = vector.broadcast %cst_13 : f32 to vector<8x8xf32>
    %62 = arith.select %58, %60, %61 : vector<8x8xi1>, vector<8x8xf32>
    %63 = vector.shape_cast %25 : vector<8x1xf32> to vector<8x1xf32>
    %64 = vector.broadcast %63 : vector<8x1xf32> to vector<8x8xf32>
    %65 = arith.select %56, %64, %62 : vector<8x8xi1>, vector<8x8xf32>
    %66 = vector.shape_cast %23 : vector<8x1xf32> to vector<8x1xf32>
    %67 = vector.broadcast %66 : vector<8x1xf32> to vector<8x8xf32>
    %68 = arith.select %54, %67, %65 : vector<8x8xi1>, vector<8x8xf32>
    %c0_14 = arith.constant 0 : index
    %c0_15 = arith.constant 0 : index
    %69 = vector.load %arg4[%c0_14, %c0_15] : memref<8x8xf32, #tpu.memory_space<vmem>>, vector<8x8xf32>
    tpu.vector_store %arg4[%c0_14, %c0_15], %68 {strides = array<i32>} : memref<8x8xf32, #tpu.memory_space<vmem>>, vector<8x8xf32>,
    return
  }
  func.func @transform_0(%arg0: i32) -> (i32, i32) {
    %c0_i32 = arith.constant 0 : i32
    %c0_i32_0 = arith.constant 0 : i32
    return %arg0, %c0_i32 : i32, i32
  }
  func.func @transform_1(%arg0: i32) -> (i32, i32) {
    %c0_i32 = arith.constant 0 : i32
    %c0_i32_0 = arith.constant 0 : i32
    %c0_i32_1 = arith.constant 0 : i32
    return %c0_i32, %c0_i32_0 : i32, i32
  }
  func.func @transform_2(%arg0: i32) -> (i32, i32) {
    %c0_i32 = arith.constant 0 : i32
    %c0_i32_0 = arith.constant 0 : i32
    return %arg0, %c0_i32 : i32, i32
  }
  func.func @transform_3(%arg0: i32) -> (i32, i32) {
    %c0_i32 = arith.constant 0 : i32
    %c0_i32_0 = arith.constant 0 : i32
    return %arg0, %c0_i32 : i32, i32
  }
}

</mosaic_0001>

<llo_original>
// kernel: tpu_custom_call.1
$region0: #{tpu_custom_call.1}
  #allocation0 [shape = 'u32[]', space=smem, size = 0x4, offset = 0x4, fixed_abs, tag = 'smem constant byte address 0x4 - core index']
  #allocation1 [shape = 'u32[144,128]{1,0:T(1,128)}', space=vmem, size = 0x12000, scoped, tag = 'internal scratch']
  %s0 = inlined_call_operand.hbm [shape: f32[8,256], index: 0, kind: input, shape index: {}]
  %s1 = inlined_call_operand.hbm [shape: f32[256,128], index: 1, kind: input, shape index: {}]
  %s2 = inlined_call_operand.hbm [shape: f32[8,256], index: 2, kind: output, shape index: {0}]
  %s3 = inlined_call_operand.hbm [shape: f32[8,8], index: 3, kind: output, shape index: {1}]
  %4 = xla_tuple %s2, %s3
  %s5 = sld [smem:[#allocation0]]
  $region34: #{tpu_custom_call.1} parent=0
    _
  %s7 = ssub.s32 1, %s5
  %s8 = scalar_select 0, %s7, %s5
  $region1: #{tpu_custom_call.1} parent=0
    #allocation2 [shape = 'u8[8192]{0}', space=vmem, size = 0x2000, scoped, tag = 'input window, operand 0, single buffered']
    #allocation3 [shape = 's32[1]{0}', space=sflag, size = 0x4, scoped, tag = 'scoped memory for tpu_custom_call.1']
    #allocation4 [shape = 's32[1]{0}', space=sflag, size = 0x4, scoped, tag = 'scoped memory for tpu_custom_call.1']
    #allocation5 [shape = 'u8[131072]{0}', space=vmem, size = 0x20000, scoped, tag = 'input window, operand 1, single buffered']
    #allocation6 [shape = 's32[1]{0}', space=sflag, size = 0x4, scoped, tag = 'scoped memory for tpu_custom_call.1']
    #allocation7 [shape = 'u8[8192]{0}', space=vmem, size = 0x2000, scoped, tag = 'output window, operand 0, single buffered']
    #allocation8 [shape = 'u8[4096]{0}', space=vmem, size = 0x1000, scoped, tag = 'output window, operand 1, single buffered']
    #allocation9 [shape = 's32[1]{0}', space=sflag, size = 0x4, scoped, tag = 'scoped memory for tpu_custom_call.1']
    %9 = vsyncpa [#allocation3], 0
    %10 = vsyncpa [#allocation6], 0
    %11 = vsyncpa [#allocation4], 0
    %12 = vsyncpa [#allocation9], 0
    // Predicated region
    $region2: #{tpu_custom_call.1} parent=1 // pred_check
      _
    $region3: #{tpu_custom_call.1} parent=1 // pred_check_branch
      %14 = sbr.rel (0) target = $region5
    $region4: #{tpu_custom_call.1} parent=1 // pred_region
      %s16 = ssub.s32 256, 256
      %17 = vsyncadd [#allocation3], %s16
      %s19 = sshll.u32 [#allocation2], 4
      %s20 = int_to_ptr.vmem [resolvable:$true] %s19
      %22 = dma.hbm_to_vmem [thread:$0]  %s0, 256, %s20, [#allocation3]
    $region5: #{tpu_custom_call.1} parent=1 // pred_fallthru
      _
    // Predicated region
    $region6: #{tpu_custom_call.1} parent=1 // pred_check
      _
    $region7: #{tpu_custom_call.1} parent=1 // pred_check_branch
      %24 = sbr.rel (0) target = $region9
    $region8: #{tpu_custom_call.1} parent=1 // pred_region
      %s26 = ssub.s32 4096, 4096
      %27 = vsyncadd [#allocation6], %s26
      %s28 = sshll.u32 [#allocation5], 4
      %s29 = int_to_ptr.vmem [resolvable:$true] %s28
      %34 = dma.hbm_to_vmem [thread:$0]  %s1, 4096, %s29, [#allocation6], 128, 128, 8
    $region9: #{tpu_custom_call.1} parent=1 // pred_fallthru
      _
    // Predicated region
    $region10: #{tpu_custom_call.1} parent=1 // pred_check
      _
    $region11: #{tpu_custom_call.1} parent=1 // pred_check_branch
      %36 = sbr.rel (0) target = $region13
    $region12: #{tpu_custom_call.1} parent=1 // pred_region
      %37 = dma.done [#allocation3], 256
    $region13: #{tpu_custom_call.1} parent=1 // pred_fallthru
      _
    // Predicated region
    $region14: #{tpu_custom_call.1} parent=1 // pred_check
      _
    $region15: #{tpu_custom_call.1} parent=1 // pred_check_branch
      %39 = sbr.rel (0) target = $region17
    $region16: #{tpu_custom_call.1} parent=1 // pred_region
      %40 = dma.done [#allocation6], 4096
    $region17: #{tpu_custom_call.1} parent=1 // pred_fallthru
      _
    %v41 = vld [vmem:[#allocation2] sm:$0xff]
    %v42 = vld [vmem:[#allocation2 + $0x8] sm:$0xff]
    %v43 = vmax.f32 %v41, %v42
    %44 = vmax.xlane.f32.xlu0 %v43
    %v45 = vpop.xlane.xlu0 %44
    %v46 = vsub.f32 %v41, %v45
    %v47 = vsub.f32 %v42, %v45
    %v48 = vmul.f32 %v46, 1.442695
    %v49 = vpow.pop %v48
    %v50 = vmul.f32 %v47, 1.442695
    %v51 = vpow.pop %v50
    %v52 = vlaneseq
    %v53 = vand.u32 %v52, 127
    %v54 = vadd.s32 %v53, 128
    %v55 = vshra.s32 %v53, 4
    %v56 = vshra.s32 %v54, 4
    %v57 = vcvt.s32.f32 %v55
    %v58 = vcvt.s32.f32 %v56
    %v59 = vand.u32 %v53, 15
    %v60 = vand.u32 %v54, 15
    %v61 = vcvt.s32.f32 %v59
    %v62 = vcvt.s32.f32 %v60
    %v63 = vld [vmem:[#allocation5] sm:$0xff]
    %v64 = vld [vmem:[#allocation5 + $0x8] sm:$0xff]
    %v65 = vld [vmem:[#allocation5 + $0x10] sm:$0xff]
    %v66 = vld [vmem:[#allocation5 + $0x18] sm:$0xff]
    %v67 = vld [vmem:[#allocation5 + $0x20] sm:$0xff]
    %v68 = vld [vmem:[#allocation5 + $0x28] sm:$0xff]
    %v69 = vld [vmem:[#allocation5 + $0x30] sm:$0xff]
    %v70 = vld [vmem:[#allocation5 + $0x38] sm:$0xff]
    %v71 = vld [vmem:[#allocation5 + $0x40] sm:$0xff]
    %v72 = vld [vmem:[#allocation5 + $0x48] sm:$0xff]
    %v73 = vld [vmem:[#allocation5 + $0x50] sm:$0xff]
    %v74 = vld [vmem:[#allocation5 + $0x58] sm:$0xff]
    %v75 = vld [vmem:[#allocation5 + $0x60] sm:$0xff]
    %v76 = vld [vmem:[#allocation5 + $0x68] sm:$0xff]
    %v77 = vld [vmem:[#allocation5 + $0x70] sm:$0xff]
    %v78 = vld [vmem:[#allocation5 + $0x78] sm:$0xff]
    %v79 = vld [vmem:[#allocation5 + $0x80] sm:$0xff]
    %v80 = vld [vmem:[#allocation5 + $0x88] sm:$0xff]
    %v81 = vld [vmem:[#allocation5 + $0x90] sm:$0xff]
    %v82 = vld [vmem:[#allocation5 + $0x98] sm:$0xff]
    %v83 = vld [vmem:[#allocation5 + $0xa0] sm:$0xff]
    %v84 = vld [vmem:[#allocation5 + $0xa8] sm:$0xff]
    %v85 = vld [vmem:[#allocation5 + $0xb0] sm:$0xff]
    %v86 = vld [vmem:[#allocation5 + $0xb8] sm:$0xff]
    %v87 = vld [vmem:[#allocation5 + $0xc0] sm:$0xff]
    %v88 = vld [vmem:[#allocation5 + $0xc8] sm:$0xff]
    %v89 = vld [vmem:[#allocation5 + $0xd0] sm:$0xff]
    %v90 = vld [vmem:[#allocation5 + $0xd8] sm:$0xff]
    %v91 = vld [vmem:[#allocation5 + $0xe0] sm:$0xff]
    %v92 = vld [vmem:[#allocation5 + $0xe8] sm:$0xff]
    %v93 = vld [vmem:[#allocation5 + $0xf0] sm:$0xff]
    %v94 = vld [vmem:[#allocation5 + $0xf8] sm:$0xff]
    %95 = vmatprep.subr.mxu0 0.0
    %v96 = vand.u32 %v63, 4294901760
    %97 = vmatpush1.msra.mxu0 %v96
    %98 = vmatprep.subr.mxu0 0.0
    %v99 = vand.u32 %v64, 4294901760
    %100 = vmatpush1.msra.mxu0 %v99
    %101 = vmatprep.subr.mxu0 0.0
    %v102 = vand.u32 %v65, 4294901760
    %103 = vmatpush1.msra.mxu0 %v102
    %104 = vmatprep.subr.mxu0 0.0
    %v105 = vand.u32 %v66, 4294901760
    %106 = vmatpush1.msra.mxu0 %v105
    %107 = vmatprep.subr.mxu0 0.0
    %v108 = vand.u32 %v67, 4294901760
    %109 = vmatpush1.msra.mxu0 %v108
    %110 = vmatprep.subr.mxu0 0.0
    %v111 = vand.u32 %v68, 4294901760
    %112 = vmatpush1.msra.mxu0 %v111
    %113 = vmatprep.subr.mxu0 0.0
    %v114 = vand.u32 %v69, 4294901760
    %115 = vmatpush1.msra.mxu0 %v114
    %116 = vmatprep.subr.mxu0 0.0
    %v117 = vand.u32 %v70, 4294901760
    %118 = vmatpush1.msra.mxu0 %v117
    %119 = vmatprep.subr.mxu0 0.0
    %v120 = vand.u32 %v71, 4294901760
    %121 = vmatpush1.msra.mxu0 %v120
    %122 = vmatprep.subr.mxu0 0.0
    %v123 = vand.u32 %v72, 4294901760
    %124 = vmatpush1.msra.mxu0 %v123
    %125 = vmatprep.subr.mxu0 0.0
    %v126 = vand.u32 %v73, 4294901760
    %127 = vmatpush1.msra.mxu0 %v126
    %128 = vmatprep.subr.mxu0 0.0
    %v129 = vand.u32 %v74, 4294901760
    %130 = vmatpush1.msra.mxu0 %v129
    %131 = vmatprep.subr.mxu0 0.0
    %v132 = vand.u32 %v75, 4294901760
    %133 = vmatpush1.msra.mxu0 %v132
    %134 = vmatprep.subr.mxu0 0.0
    %v135 = vand.u32 %v76, 4294901760
    %136 = vmatpush1.msra.mxu0 %v135
    %137 = vmatprep.subr.mxu0 0.0
    %v138 = vand.u32 %v77, 4294901760
    %139 = vmatpush1.msra.mxu0 %v138
    %140 = vmatprep.subr.mxu0 0.0
    %v141 = vand.u32 %v78, 4294901760
    %142 = vmatpush1.msra.mxu0 %v141
    %143 = vmatprep.subr.mxu0 0.0
    %v144 = vand.u32 %v79, 4294901760
    %145 = vmatpush1.msra.mxu0 %v144
    %146 = vmatprep.subr.mxu0 0.0
    %v147 = vand.u32 %v80, 4294901760
    %148 = vmatpush1.msra.mxu0 %v147
    %149 = vmatprep.subr.mxu0 0.0
    %v150 = vand.u32 %v81, 4294901760
    %151 = vmatpush1.msra.mxu0 %v150
    %152 = vmatprep.subr.mxu0 0.0
    %v153 = vand.u32 %v82, 4294901760
    %154 = vmatpush1.msra.mxu0 %v153
    %155 = vmatprep.subr.mxu0 0.0
    %v156 = vand.u32 %v83, 4294901760
    %157 = vmatpush1.msra.mxu0 %v156
    %158 = vmatprep.subr.mxu0 0.0
    %v159 = vand.u32 %v84, 4294901760
    %160 = vmatpush1.msra.mxu0 %v159
    %161 = vmatprep.subr.mxu0 0.0
    %v162 = vand.u32 %v85, 4294901760
    %163 = vmatpush1.msra.mxu0 %v162
    %164 = vmatprep.subr.mxu0 0.0
    %v165 = vand.u32 %v86, 4294901760
    %166 = vmatpush1.msra.mxu0 %v165
    %167 = vmatprep.subr.mxu0 0.0
    %v168 = vand.u32 %v87, 4294901760
    %169 = vmatpush1.msra.mxu0 %v168
    %170 = vmatprep.subr.mxu0 0.0
    %v171 = vand.u32 %v88, 4294901760
    %172 = vmatpush1.msra.mxu0 %v171
    %173 = vmatprep.subr.mxu0 0.0
    %v174 = vand.u32 %v89, 4294901760
    %175 = vmatpush1.msra.mxu0 %v174
    %176 = vmatprep.subr.mxu0 0.0
    %v177 = vand.u32 %v90, 4294901760
    %178 = vmatpush1.msra.mxu0 %v177
    %179 = vmatprep.subr.mxu0 0.0
    %v180 = vand.u32 %v91, 4294901760
    %181 = vmatpush1.msra.mxu0 %v180
    %182 = vmatprep.subr.mxu0 0.0
    %v183 = vand.u32 %v92, 4294901760
    %184 = vmatpush1.msra.mxu0 %v183
    %185 = vmatprep.subr.mxu0 0.0
    %v186 = vand.u32 %v93, 4294901760
    %187 = vmatpush1.msra.mxu0 %v186
    %188 = vmatprep.subr.mxu0 0.0
    %v189 = vand.u32 %v94, 4294901760
    %190 = vmatpush1.msra.mxu0 %v189
    %v191 = vand.u32 %v51, 4294901760
    %v192 = vsub.f32 %v51, %v191
    %v193 = vand.u32 %v192, 4294901760
    %v194 = vsub.f32 %v192, %v193
    %v195 = vand.u32 %v194, 4294901760
    %196 = vmatprep.mubr.f32.mxu0 %v195
    %v197 = vand.u32 %v49, 4294901760
    %v198 = vsub.f32 %v49, %v197
    %v199 = vand.u32 %v198, 4294901760
    %v200 = vsub.f32 %v198, %v199
    %v201 = vand.u32 %v200, 4294901760
    %202 = vmatmul.mubr.f32.gmra.mrb[0].mxu0 %v201
    %v203 = vpop.f32.mrb[0].mxu0
    %v204 = vadd.f32 0.0, %v203
    %v205 = vpop.f32.mrb[0].mxu0
    %206 = vdwg.mxu0
    %207 = vmatprep.subr.mxu0 0.0
    %v208 = vand.u32 %v63, 4294901760
    %v209 = vsub.f32 %v63, %v208
    %v210 = vand.u32 %v209, 4294901760
    %v211 = vsub.f32 %v209, %v210
    %v212 = vand.u32 %v211, 4294901760
    %213 = vmatpush1.msra.mxu0 %v212
    %214 = vmatprep.subr.mxu0 0.0
    %v215 = vand.u32 %v64, 4294901760
    %v216 = vsub.f32 %v64, %v215
    %v217 = vand.u32 %v216, 4294901760
    %v218 = vsub.f32 %v216, %v217
    %v219 = vand.u32 %v218, 4294901760
    %220 = vmatpush1.msra.mxu0 %v219
    %221 = vmatprep.subr.mxu0 0.0
    %v222 = vand.u32 %v65, 4294901760
    %v223 = vsub.f32 %v65, %v222
    %v224 = vand.u32 %v223, 4294901760
    %v225 = vsub.f32 %v223, %v224
    %v226 = vand.u32 %v225, 4294901760
    %227 = vmatpush1.msra.mxu0 %v226
    %228 = vmatprep.subr.mxu0 0.0
    %v229 = vand.u32 %v66, 4294901760
    %v230 = vsub.f32 %v66, %v229
    %v231 = vand.u32 %v230, 4294901760
    %v232 = vsub.f32 %v230, %v231
    %v233 = vand.u32 %v232, 4294901760
    %234 = vmatpush1.msra.mxu0 %v233
    %235 = vmatprep.subr.mxu0 0.0
    %v236 = vand.u32 %v67, 4294901760
    %v237 = vsub.f32 %v67, %v236
    %v238 = vand.u32 %v237, 4294901760
    %v239 = vsub.f32 %v237, %v238
    %v240 = vand.u32 %v239, 4294901760
    %241 = vmatpush1.msra.mxu0 %v240
    %242 = vmatprep.subr.mxu0 0.0
    %v243 = vand.u32 %v68, 4294901760
    %v244 = vsub.f32 %v68, %v243
    %v245 = vand.u32 %v244, 4294901760
    %v246 = vsub.f32 %v244, %v245
    %v247 = vand.u32 %v246, 4294901760
    %248 = vmatpush1.msra.mxu0 %v247
    %249 = vmatprep.subr.mxu0 0.0
    %v250 = vand.u32 %v69, 4294901760
    %v251 = vsub.f32 %v69, %v250
    %v252 = vand.u32 %v251, 4294901760
    %v253 = vsub.f32 %v251, %v252
    %v254 = vand.u32 %v253, 4294901760
    %255 = vmatpush1.msra.mxu0 %v254
    %256 = vmatprep.subr.mxu0 0.0
    %v257 = vand.u32 %v70, 4294901760
    %v258 = vsub.f32 %v70, %v257
    %v259 = vand.u32 %v258, 4294901760
    %v260 = vsub.f32 %v258, %v259
    %v261 = vand.u32 %v260, 4294901760
    %262 = vmatpush1.msra.mxu0 %v261
    %263 = vmatprep.subr.mxu0 0.0
    %v264 = vand.u32 %v71, 4294901760
    %v265 = vsub.f32 %v71, %v264
    %v266 = vand.u32 %v265, 4294901760
    %v267 = vsub.f32 %v265, %v266
    %v268 = vand.u32 %v267, 4294901760
    %269 = vmatpush1.msra.mxu0 %v268
    %270 = vmatprep.subr.mxu0 0.0
    %v271 = vand.u32 %v72, 4294901760
    %v272 = vsub.f32 %v72, %v271
    %v273 = vand.u32 %v272, 4294901760
    %v274 = vsub.f32 %v272, %v273
    %v275 = vand.u32 %v274, 4294901760
    %276 = vmatpush1.msra.mxu0 %v275
    %277 = vmatprep.subr.mxu0 0.0
    %v278 = vand.u32 %v73, 4294901760
    %v279 = vsub.f32 %v73, %v278
    %v280 = vand.u32 %v279, 4294901760
    %v281 = vsub.f32 %v279, %v280
    %v282 = vand.u32 %v281, 4294901760
    %283 = vmatpush1.msra.mxu0 %v282
    %284 = vmatprep.subr.mxu0 0.0
    %v285 = vand.u32 %v74, 4294901760
    %v286 = vsub.f32 %v74, %v285
    %v287 = vand.u32 %v286, 4294901760
    %v288 = vsub.f32 %v286, %v287
    %v289 = vand.u32 %v288, 4294901760
    %290 = vmatpush1.msra.mxu0 %v289
    %291 = vmatprep.subr.mxu0 0.0
    %v292 = vand.u32 %v75, 4294901760
    %v293 = vsub.f32 %v75, %v292
    %v294 = vand.u32 %v293, 4294901760
    %v295 = vsub.f32 %v293, %v294
    %v296 = vand.u32 %v295, 4294901760
    %297 = vmatpush1.msra.mxu0 %v296
    %298 = vmatprep.subr.mxu0 0.0
    %v299 = vand.u32 %v76, 4294901760
    %v300 = vsub.f32 %v76, %v299
    %v301 = vand.u32 %v300, 4294901760
    %v302 = vsub.f32 %v300, %v301
    %v303 = vand.u32 %v302, 4294901760
    %304 = vmatpush1.msra.mxu0 %v303
    %305 = vmatprep.subr.mxu0 0.0
    %v306 = vand.u32 %v77, 4294901760
    %v307 = vsub.f32 %v77, %v306
    %v308 = vand.u32 %v307, 4294901760
    %v309 = vsub.f32 %v307, %v308
    %v310 = vand.u32 %v309, 4294901760
    %311 = vmatpush1.msra.mxu0 %v310
    %312 = vmatprep.subr.mxu0 0.0
    %v313 = vand.u32 %v78, 4294901760
    %v314 = vsub.f32 %v78, %v313
    %v315 = vand.u32 %v314, 4294901760
    %v316 = vsub.f32 %v314, %v315
    %v317 = vand.u32 %v316, 4294901760
    %318 = vmatpush1.msra.mxu0 %v317
    %319 = vmatprep.subr.mxu0 0.0
    %v320 = vand.u32 %v79, 4294901760
    %v321 = vsub.f32 %v79, %v320
    %v322 = vand.u32 %v321, 4294901760
    %v323 = vsub.f32 %v321, %v322
    %v324 = vand.u32 %v323, 4294901760
    %325 = vmatpush1.msra.mxu0 %v324
    %326 = vmatprep.subr.mxu0 0.0
    %v327 = vand.u32 %v80, 4294901760
    %v328 = vsub.f32 %v80, %v327
    %v329 = vand.u32 %v328, 4294901760
    %v330 = vsub.f32 %v328, %v329
    %v331 = vand.u32 %v330, 4294901760
    %332 = vmatpush1.msra.mxu0 %v331
    %333 = vmatprep.subr.mxu0 0.0
    %v334 = vand.u32 %v81, 4294901760
    %v335 = vsub.f32 %v81, %v334
    %v336 = vand.u32 %v335, 4294901760
    %v337 = vsub.f32 %v335, %v336
    %v338 = vand.u32 %v337, 4294901760
    %339 = vmatpush1.msra.mxu0 %v338
    %340 = vmatprep.subr.mxu0 0.0
    %v341 = vand.u32 %v82, 4294901760
    %v342 = vsub.f32 %v82, %v341
    %v343 = vand.u32 %v342, 4294901760
    %v344 = vsub.f32 %v342, %v343
    %v345 = vand.u32 %v344, 4294901760
    %346 = vmatpush1.msra.mxu0 %v345
    %347 = vmatprep.subr.mxu0 0.0
    %v348 = vand.u32 %v83, 4294901760
    %v349 = vsub.f32 %v83, %v348
    %v350 = vand.u32 %v349, 4294901760
    %v351 = vsub.f32 %v349, %v350
    %v352 = vand.u32 %v351, 4294901760
    %353 = vmatpush1.msra.mxu0 %v352
    %354 = vmatprep.subr.mxu0 0.0
    %v355 = vand.u32 %v84, 4294901760
    %v356 = vsub.f32 %v84, %v355
    %v357 = vand.u32 %v356, 4294901760
    %v358 = vsub.f32 %v356, %v357
    %v359 = vand.u32 %v358, 4294901760
    %360 = vmatpush1.msra.mxu0 %v359
    %361 = vmatprep.subr.mxu0 0.0
    %v362 = vand.u32 %v85, 4294901760
    %v363 = vsub.f32 %v85, %v362
    %v364 = vand.u32 %v363, 4294901760
    %v365 = vsub.f32 %v363, %v364
    %v366 = vand.u32 %v365, 4294901760
    %367 = vmatpush1.msra.mxu0 %v366
    %368 = vmatprep.subr.mxu0 0.0
    %v369 = vand.u32 %v86, 4294901760
    %v370 = vsub.f32 %v86, %v369
    %v371 = vand.u32 %v370, 4294901760
    %v372 = vsub.f32 %v370, %v371
    %v373 = vand.u32 %v372, 4294901760
    %374 = vmatpush1.msra.mxu0 %v373
    %375 = vmatprep.subr.mxu0 0.0
    %v376 = vand.u32 %v87, 4294901760
    %v377 = vsub.f32 %v87, %v376
    %v378 = vand.u32 %v377, 4294901760
    %v379 = vsub.f32 %v377, %v378
    %v380 = vand.u32 %v379, 4294901760
    %381 = vmatpush1.msra.mxu0 %v380
    %382 = vmatprep.subr.mxu0 0.0
    %v383 = vand.u32 %v88, 4294901760
    %v384 = vsub.f32 %v88, %v383
    %v385 = vand.u32 %v384, 4294901760
    %v386 = vsub.f32 %v384, %v385
    %v387 = vand.u32 %v386, 4294901760
    %388 = vmatpush1.msra.mxu0 %v387
    %389 = vmatprep.subr.mxu0 0.0
    %v390 = vand.u32 %v89, 4294901760
    %v391 = vsub.f32 %v89, %v390
    %v392 = vand.u32 %v391, 4294901760
    %v393 = vsub.f32 %v391, %v392
    %v394 = vand.u32 %v393, 4294901760
    %395 = vmatpush1.msra.mxu0 %v394
    %396 = vmatprep.subr.mxu0 0.0
    %v397 = vand.u32 %v90, 4294901760
    %v398 = vsub.f32 %v90, %v397
    %v399 = vand.u32 %v398, 4294901760
    %v400 = vsub.f32 %v398, %v399
    %v401 = vand.u32 %v400, 4294901760
    %402 = vmatpush1.msra.mxu0 %v401
    %403 = vmatprep.subr.mxu0 0.0
    %v404 = vand.u32 %v91, 4294901760
    %v405 = vsub.f32 %v91, %v404
    %v406 = vand.u32 %v405, 4294901760
    %v407 = vsub.f32 %v405, %v406
    %v408 = vand.u32 %v407, 4294901760
    %409 = vmatpush1.msra.mxu0 %v408
    %410 = vmatprep.subr.mxu0 0.0
    %v411 = vand.u32 %v92, 4294901760
    %v412 = vsub.f32 %v92, %v411
    %v413 = vand.u32 %v412, 4294901760
    %v414 = vsub.f32 %v412, %v413
    %v415 = vand.u32 %v414, 4294901760
    %416 = vmatpush1.msra.mxu0 %v415
    %417 = vmatprep.subr.mxu0 0.0
    %v418 = vand.u32 %v93, 4294901760
    %v419 = vsub.f32 %v93, %v418
    %v420 = vand.u32 %v419, 4294901760
    %v421 = vsub.f32 %v419, %v420
    %v422 = vand.u32 %v421, 4294901760
    %423 = vmatpush1.msra.mxu0 %v422
    %424 = vmatprep.subr.mxu0 0.0
    %v425 = vand.u32 %v94, 4294901760
    %v426 = vsub.f32 %v94, %v425
    %v427 = vand.u32 %v426, 4294901760
    %v428 = vsub.f32 %v426, %v427
    %v429 = vand.u32 %v428, 4294901760
    %430 = vmatpush1.msra.mxu0 %v429
    %v431 = vand.u32 %v51, 4294901760
    %432 = vmatprep.mubr.f32.mxu0 %v431
    %v433 = vand.u32 %v49, 4294901760
    %434 = vmatmul.mubr.f32.gmra.mrb[0].mxu0 %v433
    %v435 = vpop.f32.mrb[0].mxu0
    %v436 = vadd.f32 %v204, %v435
    %v437 = vpop.f32.mrb[0].mxu0
    %438 = vdwg.mxu0
    %439 = vmatprep.subr.mxu0 0.0
    %v440 = vand.u32 %v63, 4294901760
    %v441 = vsub.f32 %v63, %v440
    %442 = vmatpush1.msra.mxu0 %v441
    %443 = vmatprep.subr.mxu0 0.0
    %v444 = vand.u32 %v64, 4294901760
    %v445 = vsub.f32 %v64, %v444
    %446 = vmatpush1.msra.mxu0 %v445
    %447 = vmatprep.subr.mxu0 0.0
    %v448 = vand.u32 %v65, 4294901760
    %v449 = vsub.f32 %v65, %v448
    %450 = vmatpush1.msra.mxu0 %v449
    %451 = vmatprep.subr.mxu0 0.0
    %v452 = vand.u32 %v66, 4294901760
    %v453 = vsub.f32 %v66, %v452
    %454 = vmatpush1.msra.mxu0 %v453
    %455 = vmatprep.subr.mxu0 0.0
    %v456 = vand.u32 %v67, 4294901760
    %v457 = vsub.f32 %v67, %v456
    %458 = vmatpush1.msra.mxu0 %v457
    %459 = vmatprep.subr.mxu0 0.0
    %v460 = vand.u32 %v68, 4294901760
    %v461 = vsub.f32 %v68, %v460
    %462 = vmatpush1.msra.mxu0 %v461
    %463 = vmatprep.subr.mxu0 0.0
    %v464 = vand.u32 %v69, 4294901760
    %v465 = vsub.f32 %v69, %v464
    %466 = vmatpush1.msra.mxu0 %v465
    %467 = vmatprep.subr.mxu0 0.0
    %v468 = vand.u32 %v70, 4294901760
    %v469 = vsub.f32 %v70, %v468
    %470 = vmatpush1.msra.mxu0 %v469
    %471 = vmatprep.subr.mxu0 0.0
    %v472 = vand.u32 %v71, 4294901760
    %v473 = vsub.f32 %v71, %v472
    %474 = vmatpush1.msra.mxu0 %v473
    %475 = vmatprep.subr.mxu0 0.0
    %v476 = vand.u32 %v72, 4294901760
    %v477 = vsub.f32 %v72, %v476
    %478 = vmatpush1.msra.mxu0 %v477
    %479 = vmatprep.subr.mxu0 0.0
    %v480 = vand.u32 %v73, 4294901760
    %v481 = vsub.f32 %v73, %v480
    %482 = vmatpush1.msra.mxu0 %v481
    %483 = vmatprep.subr.mxu0 0.0
    %v484 = vand.u32 %v74, 4294901760
    %v485 = vsub.f32 %v74, %v484
    %486 = vmatpush1.msra.mxu0 %v485
    %487 = vmatprep.subr.mxu0 0.0
    %v488 = vand.u32 %v75, 4294901760
    %v489 = vsub.f32 %v75, %v488
    %490 = vmatpush1.msra.mxu0 %v489
    %491 = vmatprep.subr.mxu0 0.0
    %v492 = vand.u32 %v76, 4294901760
    %v493 = vsub.f32 %v76, %v492
    %494 = vmatpush1.msra.mxu0 %v493
    %495 = vmatprep.subr.mxu0 0.0
    %v496 = vand.u32 %v77, 4294901760
    %v497 = vsub.f32 %v77, %v496
    %498 = vmatpush1.msra.mxu0 %v497
    %499 = vmatprep.subr.mxu0 0.0
    %v500 = vand.u32 %v78, 4294901760
    %v501 = vsub.f32 %v78, %v500
    %502 = vmatpush1.msra.mxu0 %v501
    %503 = vmatprep.subr.mxu0 0.0
    %v504 = vand.u32 %v79, 4294901760
    %v505 = vsub.f32 %v79, %v504
    %506 = vmatpush1.msra.mxu0 %v505
    %507 = vmatprep.subr.mxu0 0.0
    %v508 = vand.u32 %v80, 4294901760
    %v509 = vsub.f32 %v80, %v508
    %510 = vmatpush1.msra.mxu0 %v509
    %511 = vmatprep.subr.mxu0 0.0
    %v512 = vand.u32 %v81, 4294901760
    %v513 = vsub.f32 %v81, %v512
    %514 = vmatpush1.msra.mxu0 %v513
    %515 = vmatprep.subr.mxu0 0.0
    %v516 = vand.u32 %v82, 4294901760
    %v517 = vsub.f32 %v82, %v516
    %518 = vmatpush1.msra.mxu0 %v517
    %519 = vmatprep.subr.mxu0 0.0
    %v520 = vand.u32 %v83, 4294901760
    %v521 = vsub.f32 %v83, %v520
    %522 = vmatpush1.msra.mxu0 %v521
    %523 = vmatprep.subr.mxu0 0.0
    %v524 = vand.u32 %v84, 4294901760
    %v525 = vsub.f32 %v84, %v524
    %526 = vmatpush1.msra.mxu0 %v525
    %527 = vmatprep.subr.mxu0 0.0
    %v528 = vand.u32 %v85, 4294901760
    %v529 = vsub.f32 %v85, %v528
    %530 = vmatpush1.msra.mxu0 %v529
    %531 = vmatprep.subr.mxu0 0.0
    %v532 = vand.u32 %v86, 4294901760
    %v533 = vsub.f32 %v86, %v532
    %534 = vmatpush1.msra.mxu0 %v533
    %535 = vmatprep.subr.mxu0 0.0
    %v536 = vand.u32 %v87, 4294901760
    %v537 = vsub.f32 %v87, %v536
    %538 = vmatpush1.msra.mxu0 %v537
    %539 = vmatprep.subr.mxu0 0.0
    %v540 = vand.u32 %v88, 4294901760
    %v541 = vsub.f32 %v88, %v540
    %542 = vmatpush1.msra.mxu0 %v541
    %543 = vmatprep.subr.mxu0 0.0
    %v544 = vand.u32 %v89, 4294901760
    %v545 = vsub.f32 %v89, %v544
    %546 = vmatpush1.msra.mxu0 %v545
    %547 = vmatprep.subr.mxu0 0.0
    %v548 = vand.u32 %v90, 4294901760
    %v549 = vsub.f32 %v90, %v548
    %550 = vmatpush1.msra.mxu0 %v549
    %551 = vmatprep.subr.mxu0 0.0
    %v552 = vand.u32 %v91, 4294901760
    %v553 = vsub.f32 %v91, %v552
    %554 = vmatpush1.msra.mxu0 %v553
    %555 = vmatprep.subr.mxu0 0.0
    %v556 = vand.u32 %v92, 4294901760
    %v557 = vsub.f32 %v92, %v556
    %558 = vmatpush1.msra.mxu0 %v557
    %559 = vmatprep.subr.mxu0 0.0
    %v560 = vand.u32 %v93, 4294901760
    %v561 = vsub.f32 %v93, %v560
    %562 = vmatpush1.msra.mxu0 %v561
    %563 = vmatprep.subr.mxu0 0.0
    %v564 = vand.u32 %v94, 4294901760
    %v565 = vsub.f32 %v94, %v564
    %566 = vmatpush1.msra.mxu0 %v565
    %v567 = vand.u32 %v51, 4294901760
    %v568 = vsub.f32 %v51, %v567
    %569 = vmatprep.mubr.f32.mxu0 %v568
    %v570 = vand.u32 %v49, 4294901760
    %v571 = vsub.f32 %v49, %v570
    %572 = vmatmul.mubr.f32.gmra.mrb[0].mxu0 %v571
    %v573 = vpop.f32.mrb[0].mxu0
    %v574 = vadd.f32 %v436, %v573
    %v575 = vpop.f32.mrb[0].mxu0
    %576 = vdwg.mxu0
    %577 = vmatprep.subr.mxu0 0.0
    %v578 = vand.u32 %v63, 4294901760
    %579 = vmatpush1.msra.mxu0 %v578
    %580 = vmatprep.subr.mxu0 0.0
    %v581 = vand.u32 %v64, 4294901760
    %582 = vmatpush1.msra.mxu0 %v581
    %583 = vmatprep.subr.mxu0 0.0
    %v584 = vand.u32 %v65, 4294901760
    %585 = vmatpush1.msra.mxu0 %v584
    %586 = vmatprep.subr.mxu0 0.0
    %v587 = vand.u32 %v66, 4294901760
    %588 = vmatpush1.msra.mxu0 %v587
    %589 = vmatprep.subr.mxu0 0.0
    %v590 = vand.u32 %v67, 4294901760
    %591 = vmatpush1.msra.mxu0 %v590
    %592 = vmatprep.subr.mxu0 0.0
    %v593 = vand.u32 %v68, 4294901760
    %594 = vmatpush1.msra.mxu0 %v593
    %595 = vmatprep.subr.mxu0 0.0
    %v596 = vand.u32 %v69, 4294901760
    %597 = vmatpush1.msra.mxu0 %v596
    %598 = vmatprep.subr.mxu0 0.0
    %v599 = vand.u32 %v70, 4294901760
    %600 = vmatpush1.msra.mxu0 %v599
    %601 = vmatprep.subr.mxu0 0.0
    %v602 = vand.u32 %v71, 4294901760
    %603 = vmatpush1.msra.mxu0 %v602
    %604 = vmatprep.subr.mxu0 0.0
    %v605 = vand.u32 %v72, 4294901760
    %606 = vmatpush1.msra.mxu0 %v605
    %607 = vmatprep.subr.mxu0 0.0
    %v608 = vand.u32 %v73, 4294901760
    %609 = vmatpush1.msra.mxu0 %v608
    %610 = vmatprep.subr.mxu0 0.0
    %v611 = vand.u32 %v74, 4294901760
    %612 = vmatpush1.msra.mxu0 %v611
    %613 = vmatprep.subr.mxu0 0.0
    %v614 = vand.u32 %v75, 4294901760
    %615 = vmatpush1.msra.mxu0 %v614
    %616 = vmatprep.subr.mxu0 0.0
    %v617 = vand.u32 %v76, 4294901760
    %618 = vmatpush1.msra.mxu0 %v617
    %619 = vmatprep.subr.mxu0 0.0
    %v620 = vand.u32 %v77, 4294901760
    %621 = vmatpush1.msra.mxu0 %v620
    %622 = vmatprep.subr.mxu0 0.0
    %v623 = vand.u32 %v78, 4294901760
    %624 = vmatpush1.msra.mxu0 %v623
    %625 = vmatprep.subr.mxu0 0.0
    %v626 = vand.u32 %v79, 4294901760
    %627 = vmatpush1.msra.mxu0 %v626
    %628 = vmatprep.subr.mxu0 0.0
    %v629 = vand.u32 %v80, 4294901760
    %630 = vmatpush1.msra.mxu0 %v629
    %631 = vmatprep.subr.mxu0 0.0
    %v632 = vand.u32 %v81, 4294901760
    %633 = vmatpush1.msra.mxu0 %v632
    %634 = vmatprep.subr.mxu0 0.0
    %v635 = vand.u32 %v82, 4294901760
    %636 = vmatpush1.msra.mxu0 %v635
    %637 = vmatprep.subr.mxu0 0.0
    %v638 = vand.u32 %v83, 4294901760
    %639 = vmatpush1.msra.mxu0 %v638
    %640 = vmatprep.subr.mxu0 0.0
    %v641 = vand.u32 %v84, 4294901760
    %642 = vmatpush1.msra.mxu0 %v641
    %643 = vmatprep.subr.mxu0 0.0
    %v644 = vand.u32 %v85, 4294901760
    %645 = vmatpush1.msra.mxu0 %v644
    %646 = vmatprep.subr.mxu0 0.0
    %v647 = vand.u32 %v86, 4294901760
    %648 = vmatpush1.msra.mxu0 %v647
    %649 = vmatprep.subr.mxu0 0.0
    %v650 = vand.u32 %v87, 4294901760
    %651 = vmatpush1.msra.mxu0 %v650
    %652 = vmatprep.subr.mxu0 0.0
    %v653 = vand.u32 %v88, 4294901760
    %654 = vmatpush1.msra.mxu0 %v653
    %655 = vmatprep.subr.mxu0 0.0
    %v656 = vand.u32 %v89, 4294901760
    %657 = vmatpush1.msra.mxu0 %v656
    %658 = vmatprep.subr.mxu0 0.0
    %v659 = vand.u32 %v90, 4294901760
    %660 = vmatpush1.msra.mxu0 %v659
    %661 = vmatprep.subr.mxu0 0.0
    %v662 = vand.u32 %v91, 4294901760
    %663 = vmatpush1.msra.mxu0 %v662
    %664 = vmatprep.subr.mxu0 0.0
    %v665 = vand.u32 %v92, 4294901760
    %666 = vmatpush1.msra.mxu0 %v665
    %667 = vmatprep.subr.mxu0 0.0
    %v668 = vand.u32 %v93, 4294901760
    %669 = vmatpush1.msra.mxu0 %v668
    %670 = vmatprep.subr.mxu0 0.0
    %v671 = vand.u32 %v94, 4294901760
    %672 = vmatpush1.msra.mxu0 %v671
    %v673 = vand.u32 %v51, 4294901760
    %v674 = vsub.f32 %v51, %v673
    %v675 = vand.u32 %v674, 4294901760
    %676 = vmatprep.mubr.f32.mxu0 %v675
    %v677 = vand.u32 %v49, 4294901760
    %v678 = vsub.f32 %v49, %v677
    %v679 = vand.u32 %v678, 4294901760
    %680 = vmatmul.mubr.f32.gmra.mrb[0].mxu0 %v679
    %v681 = vpop.f32.mrb[0].mxu0
    %v682 = vadd.f32 %v574, %v681
    %v683 = vpop.f32.mrb[0].mxu0
    %684 = vdwg.mxu0
    %685 = vmatprep.subr.mxu0 0.0
    %v686 = vand.u32 %v63, 4294901760
    %v687 = vsub.f32 %v63, %v686
    %v688 = vand.u32 %v687, 4294901760
    %689 = vmatpush1.msra.mxu0 %v688
    %690 = vmatprep.subr.mxu0 0.0
    %v691 = vand.u32 %v64, 4294901760
    %v692 = vsub.f32 %v64, %v691
    %v693 = vand.u32 %v692, 4294901760
    %694 = vmatpush1.msra.mxu0 %v693
    %695 = vmatprep.subr.mxu0 0.0
    %v696 = vand.u32 %v65, 4294901760
    %v697 = vsub.f32 %v65, %v696
    %v698 = vand.u32 %v697, 4294901760
    %699 = vmatpush1.msra.mxu0 %v698
    %700 = vmatprep.subr.mxu0 0.0
    %v701 = vand.u32 %v66, 4294901760
    %v702 = vsub.f32 %v66, %v701
    %v703 = vand.u32 %v702, 4294901760
    %704 = vmatpush1.msra.mxu0 %v703
    %705 = vmatprep.subr.mxu0 0.0
    %v706 = vand.u32 %v67, 4294901760
    %v707 = vsub.f32 %v67, %v706
    %v708 = vand.u32 %v707, 4294901760
    %709 = vmatpush1.msra.mxu0 %v708
    %710 = vmatprep.subr.mxu0 0.0
    %v711 = vand.u32 %v68, 4294901760
    %v712 = vsub.f32 %v68, %v711
    %v713 = vand.u32 %v712, 4294901760
    %714 = vmatpush1.msra.mxu0 %v713
    %715 = vmatprep.subr.mxu0 0.0
    %v716 = vand.u32 %v69, 4294901760
    %v717 = vsub.f32 %v69, %v716
    %v718 = vand.u32 %v717, 4294901760
    %719 = vmatpush1.msra.mxu0 %v718
    %720 = vmatprep.subr.mxu0 0.0
    %v721 = vand.u32 %v70, 4294901760
    %v722 = vsub.f32 %v70, %v721
    %v723 = vand.u32 %v722, 4294901760
    %724 = vmatpush1.msra.mxu0 %v723
    %725 = vmatprep.subr.mxu0 0.0
    %v726 = vand.u32 %v71, 4294901760
    %v727 = vsub.f32 %v71, %v726
    %v728 = vand.u32 %v727, 4294901760
    %729 = vmatpush1.msra.mxu0 %v728
    %730 = vmatprep.subr.mxu0 0.0
    %v731 = vand.u32 %v72, 4294901760
    %v732 = vsub.f32 %v72, %v731
    %v733 = vand.u32 %v732, 4294901760
    %734 = vmatpush1.msra.mxu0 %v733
    %735 = vmatprep.subr.mxu0 0.0
    %v736 = vand.u32 %v73, 4294901760
    %v737 = vsub.f32 %v73, %v736
    %v738 = vand.u32 %v737, 4294901760
    %739 = vmatpush1.msra.mxu0 %v738
    %740 = vmatprep.subr.mxu0 0.0
    %v741 = vand.u32 %v74, 4294901760
    %v742 = vsub.f32 %v74, %v741
    %v743 = vand.u32 %v742, 4294901760
    %744 = vmatpush1.msra.mxu0 %v743
    %745 = vmatprep.subr.mxu0 0.0
    %v746 = vand.u32 %v75, 4294901760
    %v747 = vsub.f32 %v75, %v746
    %v748 = vand.u32 %v747, 4294901760
    %749 = vmatpush1.msra.mxu0 %v748
    %750 = vmatprep.subr.mxu0 0.0
    %v751 = vand.u32 %v76, 4294901760
    %v752 = vsub.f32 %v76, %v751
    %v753 = vand.u32 %v752, 4294901760
    %754 = vmatpush1.msra.mxu0 %v753
    %755 = vmatprep.subr.mxu0 0.0
    %v756 = vand.u32 %v77, 4294901760
    %v757 = vsub.f32 %v77, %v756
    %v758 = vand.u32 %v757, 4294901760
    %759 = vmatpush1.msra.mxu0 %v758
    %760 = vmatprep.subr.mxu0 0.0
    %v761 = vand.u32 %v78, 4294901760
    %v762 = vsub.f32 %v78, %v761
    %v763 = vand.u32 %v762, 4294901760
    %764 = vmatpush1.msra.mxu0 %v763
    %765 = vmatprep.subr.mxu0 0.0
    %v766 = vand.u32 %v79, 4294901760
    %v767 = vsub.f32 %v79, %v766
    %v768 = vand.u32 %v767, 4294901760
    %769 = vmatpush1.msra.mxu0 %v768
    %770 = vmatprep.subr.mxu0 0.0
    %v771 = vand.u32 %v80, 4294901760
    %v772 = vsub.f32 %v80, %v771
    %v773 = vand.u32 %v772, 4294901760
    %774 = vmatpush1.msra.mxu0 %v773
    %775 = vmatprep.subr.mxu0 0.0
    %v776 = vand.u32 %v81, 4294901760
    %v777 = vsub.f32 %v81, %v776
    %v778 = vand.u32 %v777, 4294901760
    %779 = vmatpush1.msra.mxu0 %v778
    %780 = vmatprep.subr.mxu0 0.0
    %v781 = vand.u32 %v82, 4294901760
    %v782 = vsub.f32 %v82, %v781
    %v783 = vand.u32 %v782, 4294901760
    %784 = vmatpush1.msra.mxu0 %v783
    %785 = vmatprep.subr.mxu0 0.0
    %v786 = vand.u32 %v83, 4294901760
    %v787 = vsub.f32 %v83, %v786
    %v788 = vand.u32 %v787, 4294901760
    %789 = vmatpush1.msra.mxu0 %v788
    %790 = vmatprep.subr.mxu0 0.0
    %v791 = vand.u32 %v84, 4294901760
    %v792 = vsub.f32 %v84, %v791
    %v793 = vand.u32 %v792, 4294901760
    %794 = vmatpush1.msra.mxu0 %v793
    %795 = vmatprep.subr.mxu0 0.0
    %v796 = vand.u32 %v85, 4294901760
    %v797 = vsub.f32 %v85, %v796
    %v798 = vand.u32 %v797, 4294901760
    %799 = vmatpush1.msra.mxu0 %v798
    %800 = vmatprep.subr.mxu0 0.0
    %v801 = vand.u32 %v86, 4294901760
    %v802 = vsub.f32 %v86, %v801
    %v803 = vand.u32 %v802, 4294901760
    %804 = vmatpush1.msra.mxu0 %v803
    %805 = vmatprep.subr.mxu0 0.0
    %v806 = vand.u32 %v87, 4294901760
    %v807 = vsub.f32 %v87, %v806
    %v808 = vand.u32 %v807, 4294901760
    %809 = vmatpush1.msra.mxu0 %v808
    %810 = vmatprep.subr.mxu0 0.0
    %v811 = vand.u32 %v88, 4294901760
    %v812 = vsub.f32 %v88, %v811
    %v813 = vand.u32 %v812, 4294901760
    %814 = vmatpush1.msra.mxu0 %v813
    %815 = vmatprep.subr.mxu0 0.0
    %v816 = vand.u32 %v89, 4294901760
    %v817 = vsub.f32 %v89, %v816
    %v818 = vand.u32 %v817, 4294901760
    %819 = vmatpush1.msra.mxu0 %v818
    %820 = vmatprep.subr.mxu0 0.0
    %v821 = vand.u32 %v90, 4294901760
    %v822 = vsub.f32 %v90, %v821
    %v823 = vand.u32 %v822, 4294901760
    %824 = vmatpush1.msra.mxu0 %v823
    %825 = vmatprep.subr.mxu0 0.0
    %v826 = vand.u32 %v91, 4294901760
    %v827 = vsub.f32 %v91, %v826
    %v828 = vand.u32 %v827, 4294901760
    %829 = vmatpush1.msra.mxu0 %v828
    %830 = vmatprep.subr.mxu0 0.0
    %v831 = vand.u32 %v92, 4294901760
    %v832 = vsub.f32 %v92, %v831
    %v833 = vand.u32 %v832, 4294901760
    %834 = vmatpush1.msra.mxu0 %v833
    %835 = vmatprep.subr.mxu0 0.0
    %v836 = vand.u32 %v93, 4294901760
    %v837 = vsub.f32 %v93, %v836
    %v838 = vand.u32 %v837, 4294901760
    %839 = vmatpush1.msra.mxu0 %v838
    %840 = vmatprep.subr.mxu0 0.0
    %v841 = vand.u32 %v94, 4294901760
    %v842 = vsub.f32 %v94, %v841
    %v843 = vand.u32 %v842, 4294901760
    %844 = vmatpush1.msra.mxu0 %v843
    %v845 = vand.u32 %v51, 4294901760
    %846 = vmatprep.mubr.f32.mxu0 %v845
    %v847 = vand.u32 %v49, 4294901760
    %848 = vmatmul.mubr.f32.gmra.mrb[0].mxu0 %v847
    %v849 = vpop.f32.mrb[0].mxu0
    %v850 = vadd.f32 %v682, %v849
    %v851 = vpop.f32.mrb[0].mxu0
    %852 = vdwg.mxu0
    %853 = vmatprep.subr.mxu0 0.0
    %v854 = vand.u32 %v63, 4294901760
    %855 = vmatpush1.msra.mxu0 %v854
    %856 = vmatprep.subr.mxu0 0.0
    %v857 = vand.u32 %v64, 4294901760
    %858 = vmatpush1.msra.mxu0 %v857
    %859 = vmatprep.subr.mxu0 0.0
    %v860 = vand.u32 %v65, 4294901760
    %861 = vmatpush1.msra.mxu0 %v860
    %862 = vmatprep.subr.mxu0 0.0
    %v863 = vand.u32 %v66, 4294901760
    %864 = vmatpush1.msra.mxu0 %v863
    %865 = vmatprep.subr.mxu0 0.0
    %v866 = vand.u32 %v67, 4294901760
    %867 = vmatpush1.msra.mxu0 %v866
    %868 = vmatprep.subr.mxu0 0.0
    %v869 = vand.u32 %v68, 4294901760
    %870 = vmatpush1.msra.mxu0 %v869
    %871 = vmatprep.subr.mxu0 0.0
    %v872 = vand.u32 %v69, 4294901760
    %873 = vmatpush1.msra.mxu0 %v872
    %874 = vmatprep.subr.mxu0 0.0
    %v875 = vand.u32 %v70, 4294901760
    %876 = vmatpush1.msra.mxu0 %v875
    %877 = vmatprep.subr.mxu0 0.0
    %v878 = vand.u32 %v71, 4294901760
    %879 = vmatpush1.msra.mxu0 %v878
    %880 = vmatprep.subr.mxu0 0.0
    %v881 = vand.u32 %v72, 4294901760
    %882 = vmatpush1.msra.mxu0 %v881
    %883 = vmatprep.subr.mxu0 0.0
    %v884 = vand.u32 %v73, 4294901760
    %885 = vmatpush1.msra.mxu0 %v884
    %886 = vmatprep.subr.mxu0 0.0
    %v887 = vand.u32 %v74, 4294901760
    %888 = vmatpush1.msra.mxu0 %v887
    %889 = vmatprep.subr.mxu0 0.0
    %v890 = vand.u32 %v75, 4294901760
    %891 = vmatpush1.msra.mxu0 %v890
    %892 = vmatprep.subr.mxu0 0.0
    %v893 = vand.u32 %v76, 4294901760
    %894 = vmatpush1.msra.mxu0 %v893
    %895 = vmatprep.subr.mxu0 0.0
    %v896 = vand.u32 %v77, 4294901760
    %897 = vmatpush1.msra.mxu0 %v896
    %898 = vmatprep.subr.mxu0 0.0
    %v899 = vand.u32 %v78, 4294901760
    %900 = vmatpush1.msra.mxu0 %v899
    %901 = vmatprep.subr.mxu0 0.0
    %v902 = vand.u32 %v79, 4294901760
    %903 = vmatpush1.msra.mxu0 %v902
    %904 = vmatprep.subr.mxu0 0.0
    %v905 = vand.u32 %v80, 4294901760
    %906 = vmatpush1.msra.mxu0 %v905
    %907 = vmatprep.subr.mxu0 0.0
    %v908 = vand.u32 %v81, 4294901760
    %909 = vmatpush1.msra.mxu0 %v908
    %910 = vmatprep.subr.mxu0 0.0
    %v911 = vand.u32 %v82, 4294901760
    %912 = vmatpush1.msra.mxu0 %v911
    %913 = vmatprep.subr.mxu0 0.0
    %v914 = vand.u32 %v83, 4294901760
    %915 = vmatpush1.msra.mxu0 %v914
    %916 = vmatprep.subr.mxu0 0.0
    %v917 = vand.u32 %v84, 4294901760
    %918 = vmatpush1.msra.mxu0 %v917
    %919 = vmatprep.subr.mxu0 0.0
    %v920 = vand.u32 %v85, 4294901760
    %921 = vmatpush1.msra.mxu0 %v920
    %922 = vmatprep.subr.mxu0 0.0
    %v923 = vand.u32 %v86, 4294901760
    %924 = vmatpush1.msra.mxu0 %v923
    %925 = vmatprep.subr.mxu0 0.0
    %v926 = vand.u32 %v87, 4294901760
    %927 = vmatpush1.msra.mxu0 %v926
    %928 = vmatprep.subr.mxu0 0.0
    %v929 = vand.u32 %v88, 4294901760
    %930 = vmatpush1.msra.mxu0 %v929
    %931 = vmatprep.subr.mxu0 0.0
    %v932 = vand.u32 %v89, 4294901760
    %933 = vmatpush1.msra.mxu0 %v932
    %934 = vmatprep.subr.mxu0 0.0
    %v935 = vand.u32 %v90, 4294901760
    %936 = vmatpush1.msra.mxu0 %v935
    %937 = vmatprep.subr.mxu0 0.0
    %v938 = vand.u32 %v91, 4294901760
    %939 = vmatpush1.msra.mxu0 %v938
    %940 = vmatprep.subr.mxu0 0.0
    %v941 = vand.u32 %v92, 4294901760
    %942 = vmatpush1.msra.mxu0 %v941
    %943 = vmatprep.subr.mxu0 0.0
    %v944 = vand.u32 %v93, 4294901760
    %945 = vmatpush1.msra.mxu0 %v944
    %946 = vmatprep.subr.mxu0 0.0
    %v947 = vand.u32 %v94, 4294901760
    %948 = vmatpush1.msra.mxu0 %v947
    %v949 = vand.u32 %v51, 4294901760
    %950 = vmatprep.mubr.f32.mxu0 %v949
    %v951 = vand.u32 %v49, 4294901760
    %952 = vmatmul.mubr.f32.gmra.mrb[0].mxu0 %v951
    %v953 = vpop.f32.mrb[0].mxu0
    %v954 = vadd.f32 %v850, %v953
    %v955 = vpop.f32.mrb[0].mxu0
    %956 = vdwg.mxu0
    %v957 = vrcp.pop %v954
    %959 = vrot.lane.b32.xlu0 %v957, 1
    %v960 = vpop.permute.xlu0 %959
    %v962 = vmul.f32 %v954, %v960
    %963 = vrot.lane.b32.xlu0 %v957, 2
    %v964 = vpop.permute.xlu0 %963
    %v966 = vmul.f32 %v954, %v964
    %v967 = vadd.f32 %v962, 7.5
    %v968 = vadd.f32 %v966, 7.5
    %969 = vrot.lane.b32.xlu0 %v957, 3
    %v970 = vpop.permute.xlu0 %969
    %v972 = vmul.f32 %v954, %v970
    %v973 = vmul.f32 %v962, %v962
    %975 = vrot.lane.b32.xlu0 %v973, 2
    %v976 = vpop.permute.xlu0 %975
    %v978 = vsub.f32 %v972, %v976
    %v979 = vmul.f32 %v966, %v966
    %981 = vrot.lane.b32.xlu0 %v979, 1
    %v982 = vpop.permute.xlu0 %981
    %v984 = vsub.f32 %v978, %v982
    %v985 = vmax.f32 %v984, 0.0
    %v986 = vmul.f32 %v985, 0.001953125
    %988 = vset.pattern.permute.xlu0 1
    %989 = vperm.xlu0 %988, %v967
    %v990 = vpop.permute.xlu0 %989
    %v992 = vsub.f32 %v57, %v990
    %v993 = vsub.f32 %v58, %v990
    %995 = vset.pattern.permute.xlu0 2
    %996 = vperm.xlu0 %995, %v968
    %v997 = vpop.permute.xlu0 %996
    %v999 = vsub.f32 %v61, %v997
    %v1000 = vsub.f32 %v62, %v997
    %v1001 = vmul.f32 %v992, %v992
    %v1002 = vmul.f32 %v993, %v993
    %v1003 = vmul.f32 %v999, %v999
    %v1004 = vmul.f32 %v1000, %v1000
    %v1005 = vadd.f32 %v1001, %v1003
    %v1006 = vadd.f32 %v1002, %v1004
    %v1007 = vsub.f32 0.0, %v1005
    %v1008 = vsub.f32 0.0, %v1006
    %v1009 = vmul.f32 %v1007, 0.125
    %v1010 = vmul.f32 %v1008, 0.125
    %v1011 = vmul.f32 %v1009, 1.442695
    %v1012 = vpow.pop %v1011
    %v1013 = vmul.f32 %v1010, 1.442695
    %v1014 = vpow.pop %v1013
    %v1015 = vmul.f32 %v1012, 0.039788734
    %v1016 = vmul.f32 %v1014, 0.039788734
    %1017 = vst [vmem:[#allocation7] sm:$0xff] %v1015
    %1018 = vst [vmem:[#allocation7 + $0x8] sm:$0xff] %v1016
    %vm1019 = vcmp.eq.s32.totalorder %v53, 0
    %vm1020 = vcmp.eq.s32.totalorder %v53, 1
    %vm1021 = vcmp.eq.s32.totalorder %v53, 2
    %1023 = vset.pattern.permute.xlu0 3
    %1024 = vperm.xlu0 %1023, %v986
    %v1025 = vpop.permute.xlu0 %1024
    %v1027 = vsel %vm1021, %v1025, 0.0
    %v1028 = vsel %vm1020, %v997, %v1027
    %v1029 = vsel %vm1019, %v990, %v1028
    %vm1030 = vcmask 64512
    %1031 = vst.msk [vmem:[#allocation8] sm:$0xff] %vm1030, %v1029
    // Predicated region
    $region18: #{tpu_custom_call.1} parent=1 // pred_check
      _
    $region19: #{tpu_custom_call.1} parent=1 // pred_check_branch
      %1033 = sbr.rel (0) target = $region21
    $region20: #{tpu_custom_call.1} parent=1 // pred_region
      %s1035 = ssub.s32 256, 256
      %1036 = vsyncadd [#allocation4], %s1035
      %s1038 = sshll.u32 [#allocation7], 4
      %s1039 = int_to_ptr.vmem [resolvable:$true] %s1038
      %1041 = dma.vmem_to_hbm [thread:$0]  %s1039, 256, %s2, [#allocation4]
    $region21: #{tpu_custom_call.1} parent=1 // pred_fallthru
      _
    // Predicated region
    $region22: #{tpu_custom_call.1} parent=1 // pred_check
      _
    $region23: #{tpu_custom_call.1} parent=1 // pred_check_branch
      %1043 = sbr.rel (0) target = $region25
    $region24: #{tpu_custom_call.1} parent=1 // pred_region
      %s1045 = ssub.s32 128, 128
      %1046 = vsyncadd [#allocation9], %s1045
      %s1048 = sshll.u32 [#allocation8], 4
      %s1049 = int_to_ptr.vmem [resolvable:$true] %s1048
      %1051 = dma.vmem_to_hbm [thread:$0]  %s1049, 128, %s3, [#allocation9]
    $region25: #{tpu_custom_call.1} parent=1 // pred_fallthru
      _
    // Predicated region
    $region26: #{tpu_custom_call.1} parent=1 // pred_check
      _
    $region27: #{tpu_custom_call.1} parent=1 // pred_check_branch
      %1053 = sbr.rel (0) target = $region29
    $region28: #{tpu_custom_call.1} parent=1 // pred_region
      %1054 = dma.done [#allocation4], 256
    $region29: #{tpu_custom_call.1} parent=1 // pred_fallthru
      _
    // Predicated region
    $region30: #{tpu_custom_call.1} parent=1 // pred_check
      _
    $region31: #{tpu_custom_call.1} parent=1 // pred_check_branch
      %1056 = sbr.rel (0) target = $region33
    $region32: #{tpu_custom_call.1} parent=1 // pred_region
      %1057 = dma.done [#allocation9], 128
    $region33: #{tpu_custom_call.1} parent=1 // pred_fallthru
      _
    %1058 = vsyncpa [#allocation3], 1
    %1059 = vsyncpa [#allocation6], 1
    %1060 = vsyncpa [#allocation4], 1
    %1061 = vsyncpa [#allocation9], 1

</llo_original>
